<compile_context>
chip_gen: v7x
topology: tpu7x:2x2x1
jax: 0.10.0
libtpu: 0.0.40
codegen_flags: <defaults>
</compile_context>

<pallas_src>
import jax
import jax.numpy as jnp
from jax.experimental import pallas as pl
from jax.experimental.pallas import tpu as pltpu


def _make_outconv_kernel(C_in, C_out):
    def kernel(w_ref, b_ref, x_ref, o_ref):
        # w_ref: SMEM (C_out*C_in,) f32   (scalar-prefetched)
        # b_ref: SMEM (C_out,)      f32   (scalar-prefetched)
        # x_ref: VMEM (bn, C_in, TS)
        # o_ref: VMEM (bn, C_out, TS)
        x = x_ref[...].astype(jnp.float32)               # (bn, C_in, TS)
        for co in range(C_out):                          # unrolled: tiny, static
            acc = x[:, 0, :] * w_ref[co * C_in + 0]      # scalar * vector (VPU)
            for ci in range(1, C_in):
                acc = acc + x[:, ci, :] * w_ref[co * C_in + ci]
            acc = acc + b_ref[co]
            o_ref[:, co, :] = acc.astype(o_ref.dtype)
    return kernel


def outconv_1x1(x_nchw, weight, bias, *,
                max_spatial_tile=65536,
                vmem_budget_bytes=12 * 1024 * 1024,
                fold_batch_threshold_bytes=2 * 1024 * 1024):
    """1x1 Conv2d forward (nn.Conv2d(C_in, C_out, kernel_size=1)).

    x_nchw : (N, C_in, H, W)
    weight : (C_out, C_in, 1, 1)
    bias   : (C_out,)
    returns: (N, C_out, H, W)
    """
    N, C_in, H, W = x_nchw.shape
    C_out = weight.shape[0]
    assert weight.shape == (C_out, C_in, 1, 1)
    assert bias.shape == (C_out,)
    HW = H * W
    itemsize = jnp.dtype(x_nchw.dtype).itemsize

    # --- tiling decisions ---------------------------------------------------
    total_bytes = N * (C_in + C_out) * HW * itemsize
    fold_batch = total_bytes <= fold_batch_threshold_bytes
    bn = N if fold_batch else 1

    # bytes per spatial element per grid step (in + out, double-buffered)
    per_elem = bn * (C_in + C_out) * itemsize * 2
    if HW <= max_spatial_tile and HW * per_elem <= vmem_budget_bytes:
        ts = HW                                   # full-extent block (always legal)
    else:
        cap = min(max_spatial_tile, vmem_budget_bytes // per_elem)
        ts = max(128, (cap // 128) * 128)         # large 128-multiple; ragged tail
                                                  # handled by cdiv + masked writeback
    grid = (N // bn, pl.cdiv(HW, ts))

    # --- free reshapes only (no NCHW<->NHWC transposes) ----------------------
    x_rows = x_nchw.reshape(N, C_in, HW)
    w_flat = weight.reshape(C_out * C_in).astype(jnp.float32)   # 12 scalars -> SMEM
    b_vec = bias.reshape(C_out).astype(jnp.float32)             #  3 scalars -> SMEM

    cost = pl.CostEstimate(
        flops=2 * N * HW * C_in * C_out,
        transcendentals=0,
        bytes_accessed=N * (C_in + C_out) * HW * itemsize
        + (C_out * C_in + C_out) * 4,
    )

    out_rows = pl.pallas_call(
        _make_outconv_kernel(C_in, C_out),
        out_shape=jax.ShapeDtypeStruct((N, C_out, HW), x_nchw.dtype),
        grid_spec=pltpu.PrefetchScalarGridSpec(
            num_scalar_prefetch=2,                # weight + bias live in SMEM
            grid=grid,
            in_specs=[
                pl.BlockSpec((bn, C_in, ts), lambda n, s, *_: (n, 0, s)),
            ],
            out_specs=pl.BlockSpec((bn, C_out, ts), lambda n, s, *_: (n, 0, s)),
        ),
        compiler_params=pltpu.CompilerParams(
            dimension_semantics=("parallel", "parallel")),
        cost_estimate=cost,
    )(w_flat, b_vec, x_rows)

    return out_rows.reshape(N, C_out, H, W)


def _reference(x, weight, bias):
    C_out, C_in = weight.shape[0], weight.shape[1]
    return jnp.einsum("nchw,oc->nohw", x, weight.reshape(C_out, C_in)) \
        + bias.reshape(1, C_out, 1, 1)


if __name__ == "__main__":
    # OutConv(in_channels=4, out_channels=3), input x: (2, 4, 16, 16)
    N, C_in, C_out, H, W = 2, 4, 3, 16, 16

    key = jax.random.PRNGKey(0)
    kx, kw, kb = jax.random.split(key, 3)

    x = jax.random.normal(kx, (N, C_in, H, W), dtype=jnp.float32)
    # Deterministic synthetic params with nn.Conv2d shapes:
    #   weight: (out_channels, in_channels, 1, 1), bias: (out_channels,)
    weight = jax.random.normal(kw, (C_out, C_in, 1, 1), dtype=jnp.float32) * 0.1
    bias = jax.random.normal(kb, (C_out,), dtype=jnp.float32) * 0.1

    # Small-shape path: batch folded, single grid step.
    out = outconv_1x1(x, weight, bias)
    out = jax.block_until_ready(out)
    ref = _reference(x, weight, bias)
    assert out.shape == (N, C_out, H, W)
    assert jnp.allclose(out, ref, atol=1e-5, rtol=1e-5)

    # Also exercise the tiled / ragged-tail / non-folded path on a small shape
    # by forcing small tiles and no batch folding.
    H2 = W2 = 20                                   # HW = 400 -> tiles of 256 + tail
    x2 = jax.random.normal(kx, (N, C_in, H2, W2), dtype=jnp.float32)
    out2 = outconv_1x1(x2, weight, bias,
                       max_spatial_tile=256,
                       fold_batch_threshold_bytes=0)
    out2 = jax.block_until_ready(out2)
    ref2 = _reference(x2, weight, bias)
    assert out2.shape == (N, C_out, H2, W2)
    assert jnp.allclose(out2, ref2, atol=1e-5, rtol=1e-5)

    print("KERNEL_OK")
</pallas_src>

<mosaic_0001>
module attributes {stable_mosaic.version = 11 : i64} {
  func.func @kernel(%arg0: i32, %arg1: i32, %arg2: memref<12xf32, #tpu.memory_space<smem>>, %arg3: memref<3xf32, #tpu.memory_space<smem>>, %arg4: memref<2x4x256xf32, #tpu.memory_space<vmem>>, %arg5: memref<2x3x256xf32, #tpu.memory_space<vmem>>) attributes {dimension_semantics = [#tpu.dimension_semantics<parallel>, #tpu.dimension_semantics<parallel>], iteration_bounds = array<i64: 1, 1>, scalar_prefetch = 2 : i64, scratch_operands = 0 : i64, tpu.core_type = #tpu.core_type<tc>, window_params = [{transform_indices = @transform_0, window_bounds = array<i64: 2, 4, 256>}, {transform_indices = @transform_1, window_bounds = array<i64: 2, 3, 256>}]} {
    %c0 = arith.constant 0 : index
    %c0_0 = arith.constant 0 : index
    %c0_1 = arith.constant 0 : index
    %0 = vector.load %arg4[%c0, %c0_0, %c0_1] : memref<2x4x256xf32, #tpu.memory_space<vmem>>, vector<2x4x256xf32>
    %1 = vector.extract_strided_slice %0 {offsets = [0, 0, 0], sizes = [2, 1, 256], strides = [1, 1, 1]} : vector<2x4x256xf32> to vector<2x1x256xf32>
    %2 = vector.shape_cast %1 : vector<2x1x256xf32> to vector<2x256xf32>
    %c0_2 = arith.constant 0 : index
    %3 = memref.load %arg2[%c0_2] : memref<12xf32, #tpu.memory_space<smem>>
    %4 = vector.broadcast %3 : f32 to vector<2x256xf32>
    %5 = arith.mulf %2, %4 : vector<2x256xf32>
    %6 = vector.extract_strided_slice %0 {offsets = [0, 1, 0], sizes = [2, 1, 256], strides = [1, 1, 1]} : vector<2x4x256xf32> to vector<2x1x256xf32>
    %7 = vector.shape_cast %6 : vector<2x1x256xf32> to vector<2x256xf32>
    %c1 = arith.constant 1 : index
    %8 = memref.load %arg2[%c1] : memref<12xf32, #tpu.memory_space<smem>>
    %9 = vector.broadcast %8 : f32 to vector<2x256xf32>
    %10 = arith.mulf %7, %9 : vector<2x256xf32>
    %11 = arith.addf %5, %10 : vector<2x256xf32>
    %12 = vector.extract_strided_slice %0 {offsets = [0, 2, 0], sizes = [2, 1, 256], strides = [1, 1, 1]} : vector<2x4x256xf32> to vector<2x1x256xf32>
    %13 = vector.shape_cast %12 : vector<2x1x256xf32> to vector<2x256xf32>
    %c2 = arith.constant 2 : index
    %14 = memref.load %arg2[%c2] : memref<12xf32, #tpu.memory_space<smem>>
    %15 = vector.broadcast %14 : f32 to vector<2x256xf32>
    %16 = arith.mulf %13, %15 : vector<2x256xf32>
    %17 = arith.addf %11, %16 : vector<2x256xf32>
    %18 = vector.extract_strided_slice %0 {offsets = [0, 3, 0], sizes = [2, 1, 256], strides = [1, 1, 1]} : vector<2x4x256xf32> to vector<2x1x256xf32>
    %19 = vector.shape_cast %18 : vector<2x1x256xf32> to vector<2x256xf32>
    %c3 = arith.constant 3 : index
    %20 = memref.load %arg2[%c3] : memref<12xf32, #tpu.memory_space<smem>>
    %21 = vector.broadcast %20 : f32 to vector<2x256xf32>
    %22 = arith.mulf %19, %21 : vector<2x256xf32>
    %23 = arith.addf %17, %22 : vector<2x256xf32>
    %c0_3 = arith.constant 0 : index
    %24 = memref.load %arg3[%c0_3] : memref<3xf32, #tpu.memory_space<smem>>
    %25 = vector.broadcast %24 : f32 to vector<2x256xf32>
    %26 = arith.addf %23, %25 : vector<2x256xf32>
    %c0_4 = arith.constant 0 : index
    %c0_5 = arith.constant 0 : index
    %c0_6 = arith.constant 0 : index
    %27 = vector.load %arg5[%c0_4, %c0_5, %c0_6] : memref<2x3x256xf32, #tpu.memory_space<vmem>>, vector<2x1x256xf32>
    %28 = vector.shape_cast %27 : vector<2x1x256xf32> to vector<2x256xf32>
    %29 = vector.shape_cast %26 : vector<2x256xf32> to vector<2x1x256xf32>
    tpu.vector_store %arg5[%c0_4, %c0_5, %c0_6], %29 {strides = array<i32>} : memref<2x3x256xf32, #tpu.memory_space<vmem>>, vector<2x1x256xf32>,
    %30 = vector.extract_strided_slice %0 {offsets = [0, 0, 0], sizes = [2, 1, 256], strides = [1, 1, 1]} : vector<2x4x256xf32> to vector<2x1x256xf32>
    %31 = vector.shape_cast %30 : vector<2x1x256xf32> to vector<2x256xf32>
    %c4 = arith.constant 4 : index
    %32 = memref.load %arg2[%c4] : memref<12xf32, #tpu.memory_space<smem>>
    %33 = vector.broadcast %32 : f32 to vector<2x256xf32>
    %34 = arith.mulf %31, %33 : vector<2x256xf32>
    %35 = vector.extract_strided_slice %0 {offsets = [0, 1, 0], sizes = [2, 1, 256], strides = [1, 1, 1]} : vector<2x4x256xf32> to vector<2x1x256xf32>
    %36 = vector.shape_cast %35 : vector<2x1x256xf32> to vector<2x256xf32>
    %c5 = arith.constant 5 : index
    %37 = memref.load %arg2[%c5] : memref<12xf32, #tpu.memory_space<smem>>
    %38 = vector.broadcast %37 : f32 to vector<2x256xf32>
    %39 = arith.mulf %36, %38 : vector<2x256xf32>
    %40 = arith.addf %34, %39 : vector<2x256xf32>
    %41 = vector.extract_strided_slice %0 {offsets = [0, 2, 0], sizes = [2, 1, 256], strides = [1, 1, 1]} : vector<2x4x256xf32> to vector<2x1x256xf32>
    %42 = vector.shape_cast %41 : vector<2x1x256xf32> to vector<2x256xf32>
    %c6 = arith.constant 6 : index
    %43 = memref.load %arg2[%c6] : memref<12xf32, #tpu.memory_space<smem>>
    %44 = vector.broadcast %43 : f32 to vector<2x256xf32>
    %45 = arith.mulf %42, %44 : vector<2x256xf32>
    %46 = arith.addf %40, %45 : vector<2x256xf32>
    %47 = vector.extract_strided_slice %0 {offsets = [0, 3, 0], sizes = [2, 1, 256], strides = [1, 1, 1]} : vector<2x4x256xf32> to vector<2x1x256xf32>
    %48 = vector.shape_cast %47 : vector<2x1x256xf32> to vector<2x256xf32>
    %c7 = arith.constant 7 : index
    %49 = memref.load %arg2[%c7] : memref<12xf32, #tpu.memory_space<smem>>
    %50 = vector.broadcast %49 : f32 to vector<2x256xf32>
    %51 = arith.mulf %48, %50 : vector<2x256xf32>
    %52 = arith.addf %46, %51 : vector<2x256xf32>
    %c1_7 = arith.constant 1 : index
    %53 = memref.load %arg3[%c1_7] : memref<3xf32, #tpu.memory_space<smem>>
    %54 = vector.broadcast %53 : f32 to vector<2x256xf32>
    %55 = arith.addf %52, %54 : vector<2x256xf32>
    %c0_8 = arith.constant 0 : index
    %c1_9 = arith.constant 1 : index
    %c0_10 = arith.constant 0 : index
    %56 = vector.load %arg5[%c0_8, %c1_9, %c0_10] : memref<2x3x256xf32, #tpu.memory_space<vmem>>, vector<2x1x256xf32>
    %57 = vector.shape_cast %56 : vector<2x1x256xf32> to vector<2x256xf32>
    %58 = vector.shape_cast %55 : vector<2x256xf32> to vector<2x1x256xf32>
    tpu.vector_store %arg5[%c0_8, %c1_9, %c0_10], %58 {strides = array<i32>} : memref<2x3x256xf32, #tpu.memory_space<vmem>>, vector<2x1x256xf32>,
    %59 = vector.extract_strided_slice %0 {offsets = [0, 0, 0], sizes = [2, 1, 256], strides = [1, 1, 1]} : vector<2x4x256xf32> to vector<2x1x256xf32>
    %60 = vector.shape_cast %59 : vector<2x1x256xf32> to vector<2x256xf32>
    %c8 = arith.constant 8 : index
    %61 = memref.load %arg2[%c8] : memref<12xf32, #tpu.memory_space<smem>>
    %62 = vector.broadcast %61 : f32 to vector<2x256xf32>
    %63 = arith.mulf %60, %62 : vector<2x256xf32>
    %64 = vector.extract_strided_slice %0 {offsets = [0, 1, 0], sizes = [2, 1, 256], strides = [1, 1, 1]} : vector<2x4x256xf32> to vector<2x1x256xf32>
    %65 = vector.shape_cast %64 : vector<2x1x256xf32> to vector<2x256xf32>
    %c9 = arith.constant 9 : index
    %66 = memref.load %arg2[%c9] : memref<12xf32, #tpu.memory_space<smem>>
    %67 = vector.broadcast %66 : f32 to vector<2x256xf32>
    %68 = arith.mulf %65, %67 : vector<2x256xf32>
    %69 = arith.addf %63, %68 : vector<2x256xf32>
    %70 = vector.extract_strided_slice %0 {offsets = [0, 2, 0], sizes = [2, 1, 256], strides = [1, 1, 1]} : vector<2x4x256xf32> to vector<2x1x256xf32>
    %71 = vector.shape_cast %70 : vector<2x1x256xf32> to vector<2x256xf32>
    %c10 = arith.constant 10 : index
    %72 = memref.load %arg2[%c10] : memref<12xf32, #tpu.memory_space<smem>>
    %73 = vector.broadcast %72 : f32 to vector<2x256xf32>
    %74 = arith.mulf %71, %73 : vector<2x256xf32>
    %75 = arith.addf %69, %74 : vector<2x256xf32>
    %76 = vector.extract_strided_slice %0 {offsets = [0, 3, 0], sizes = [2, 1, 256], strides = [1, 1, 1]} : vector<2x4x256xf32> to vector<2x1x256xf32>
    %77 = vector.shape_cast %76 : vector<2x1x256xf32> to vector<2x256xf32>
    %c11 = arith.constant 11 : index
    %78 = memref.load %arg2[%c11] : memref<12xf32, #tpu.memory_space<smem>>
    %79 = vector.broadcast %78 : f32 to vector<2x256xf32>
    %80 = arith.mulf %77, %79 : vector<2x256xf32>
    %81 = arith.addf %75, %80 : vector<2x256xf32>
    %c2_11 = arith.constant 2 : index
    %82 = memref.load %arg3[%c2_11] : memref<3xf32, #tpu.memory_space<smem>>
    %83 = vector.broadcast %82 : f32 to vector<2x256xf32>
    %84 = arith.addf %81, %83 : vector<2x256xf32>
    %c0_12 = arith.constant 0 : index
    %c2_13 = arith.constant 2 : index
    %c0_14 = arith.constant 0 : index
    %85 = vector.load %arg5[%c0_12, %c2_13, %c0_14] : memref<2x3x256xf32, #tpu.memory_space<vmem>>, vector<2x1x256xf32>
    %86 = vector.shape_cast %85 : vector<2x1x256xf32> to vector<2x256xf32>
    %87 = vector.shape_cast %84 : vector<2x256xf32> to vector<2x1x256xf32>
    tpu.vector_store %arg5[%c0_12, %c2_13, %c0_14], %87 {strides = array<i32>} : memref<2x3x256xf32, #tpu.memory_space<vmem>>, vector<2x1x256xf32>,
    return
  }
  func.func @transform_0(%arg0: i32, %arg1: i32, %arg2: memref<12xf32, #tpu.memory_space<smem>>, %arg3: memref<3xf32, #tpu.memory_space<smem>>) -> (i32, i32, i32) {
    %c0_i32 = arith.constant 0 : i32
    %c0_i32_0 = arith.constant 0 : i32
    return %arg0, %c0_i32, %arg1 : i32, i32, i32
  }
  func.func @transform_1(%arg0: i32, %arg1: i32, %arg2: memref<12xf32, #tpu.memory_space<smem>>, %arg3: memref<3xf32, #tpu.memory_space<smem>>) -> (i32, i32, i32) {
    %c0_i32 = arith.constant 0 : i32
    %c0_i32_0 = arith.constant 0 : i32
    return %arg0, %c0_i32, %arg1 : i32, i32, i32
  }
}

</mosaic_0001>

<llo_original>
// kernel: tpu_custom_call.1
$region0: #{tpu_custom_call.1}
  #allocation0 [shape = 'u32[]', space=smem, size = 0x4, offset = 0x4, fixed_abs, tag = 'smem constant byte address 0x4 - core index']
  #allocation1 [shape = 'u32[144,128]{1,0:T(1,128)}', space=vmem, size = 0x12000, scoped, tag = 'internal scratch']
  #allocation2 [shape = 's32[1]{0}', space=sflag, size = 0x4, scoped, tag = 'scoped memory for tpu_custom_call.1']
  #allocation3 [shape = 'u8[512]{0}', space=smem, size = 0x200, scoped, tag = 'prefetched SMEM operand 0']
  #allocation4 [shape = 'u8[512]{0}', space=smem, size = 0x200, scoped, tag = 'prefetched SMEM operand 1']
  %s0 = inlined_call_operand.hbm [shape: f32[12], index: 0, kind: input, shape index: {}]
  %s1 = inlined_call_operand.vmem [shape: f32[3], index: 1, kind: input, shape index: {}]
  %s2 = inlined_call_operand.hbm [shape: f32[2,4,256], index: 2, kind: input, shape index: {}]
  %s3 = inlined_call_operand.vmem [shape: f32[2,3,256], index: 3, kind: output, shape index: {}]
  %s4 = sld [smem:[#allocation0]]
  $region18: #{tpu_custom_call.1} parent=0
    _
  %s6 = ssub.s32 1, %s4
  %s7 = scalar_select 0, %s6, %s4
  %9 = dma.hbm_to_smem %s0, 16, [#allocation3], [#allocation2]
  %s10 = sshll.u32 %s1, 4
  %s11 = int_to_ptr.vmem [resolvable:$true] %s10
  %13 = dma.vmem_to_smem %s11, 16, [#allocation4], [#allocation2]
  %14 = dma.done [#allocation2], 32
  %15 = sfence
  $region1: #{tpu_custom_call.1} parent=0
    #allocation5 [shape = 'u8[8192]{0}', space=vmem, size = 0x2000, scoped, tag = 'input window, operand 2, single buffered']
    #allocation6 [shape = 's32[1]{0}', space=sflag, size = 0x4, scoped, tag = 'scoped memory for tpu_custom_call.1']
    %16 = vsyncpa [#allocation6], 0
    // Predicated region
    $region2: #{tpu_custom_call.1} parent=1 // pred_check
      _
    $region3: #{tpu_custom_call.1} parent=1 // pred_check_branch
      %18 = sbr.rel (0) target = $region5
    $region4: #{tpu_custom_call.1} parent=1 // pred_region
      %s20 = ssub.s32 256, 256
      %21 = vsyncadd [#allocation6], %s20
      %s22 = sshll.u32 [#allocation5], 4
      %s23 = int_to_ptr.vmem [resolvable:$true] %s22
      %28 = dma.hbm_to_vmem [thread:$0]  %s2, 256, %s23, [#allocation6], 128, 128, 8
    $region5: #{tpu_custom_call.1} parent=1 // pred_fallthru
      _
    // Predicated region
    $region6: #{tpu_custom_call.1} parent=1 // pred_check
      _
    $region7: #{tpu_custom_call.1} parent=1 // pred_check_branch
      %30 = sbr.rel (0) target = $region9
    $region8: #{tpu_custom_call.1} parent=1 // pred_region
      %31 = dma.done [#allocation6], 256
    $region9: #{tpu_custom_call.1} parent=1 // pred_fallthru
      _
    %v32 = vld [vmem:[#allocation5] sm:$0xff]
    %v33 = vld [vmem:[#allocation5 + $0x8] sm:$0xff]
    %s34 = sld [smem:[#allocation3]]
    %v35 = vstv %s34
    %v36 = vmul.f32 %v32, %v35
    %v37 = vmul.f32 %v33, %v35
    %s38 = sld [smem:[#allocation3 + $0x1]]
    %v39 = vstv %s38
    %v40 = vmul.f32 %v32, %v39
    %v41 = vmul.f32 %v33, %v39
    %v44 = vrot.slane %v40, 5
    %v45 = vrot.slane %v44, 4
    %v46 = vrot.slane %v41, 5
    %v47 = vrot.slane %v46, 4
    %v50 = vadd.f32 %v36, %v45
    %v51 = vadd.f32 %v37, %v47
    %s52 = sld [smem:[#allocation3 + $0x2]]
    %v53 = vstv %s52
    %v54 = vmul.f32 %v32, %v53
    %v55 = vmul.f32 %v33, %v53
    %v58 = vrot.slane %v54, 6
    %v59 = vrot.slane %v58, 4
    %v60 = vrot.slane %v55, 6
    %v61 = vrot.slane %v60, 4
    %v64 = vadd.f32 %v50, %v59
    %v65 = vadd.f32 %v51, %v61
    %s66 = sld [smem:[#allocation3 + $0x3]]
    %v67 = vstv %s66
    %v68 = vmul.f32 %v32, %v67
    %v69 = vmul.f32 %v33, %v67
    %v72 = vrot.slane %v68, 7
    %v73 = vrot.slane %v72, 4
    %v74 = vrot.slane %v69, 7
    %v75 = vrot.slane %v74, 4
    %v78 = vadd.f32 %v64, %v73
    %v79 = vadd.f32 %v65, %v75
    %s80 = sld [smem:[#allocation4]]
    %v81 = vstv %s80
    %v82 = vadd.f32 %v78, %v81
    %v83 = vadd.f32 %v79, %v81
    %v87 = vunpack.c.l.s4 1966171168
    %v88 = vunpack.c.0.s8 %v87
    %v89 = vlaneseq
    %v90 = vshrl.u32 %v89, 7
    %v91 = vsub.s32 %v88, %v90
    %v92 = vrot.slane %v82, %v91
    %v94 = vunpack.c.l.s4 1966171168
    %v95 = vunpack.c.0.s8 %v94
    %v96 = vlaneseq
    %v97 = vshrl.u32 %v96, 7
    %v98 = vsub.s32 %v95, %v97
    %v99 = vrot.slane %v92, %v98
    %v101 = vunpack.c.l.s4 1966171168
    %v102 = vunpack.c.0.s8 %v101
    %v103 = vlaneseq
    %v104 = vshrl.u32 %v103, 7
    %v105 = vsub.s32 %v102, %v104
    %v106 = vrot.slane %v83, %v105
    %v108 = vunpack.c.l.s4 1966171168
    %v109 = vunpack.c.0.s8 %v108
    %v110 = vlaneseq
    %v111 = vshrl.u32 %v110, 7
    %v112 = vsub.s32 %v109, %v111
    %v113 = vrot.slane %v106, %v112
    %v116 = vlaneseq
    %vm117 = vcmp.ge.s32.totalorder %v116, 0
    %vm118 = vcmp.lt.s32.totalorder %v116, 256
    %vm119 = vmand %vm117, %vm118
    %120 = vst.msk [vmem:[%s3] ss:$4 sm:$0x3] %vm119, %v99
    %s121 = scalar_lea.vmem %s3, 8
    %122 = vst.msk [vmem:[%s121] ss:$4 sm:$0x3] %vm119, %v113
    %s123 = sld [smem:[#allocation3 + $0x4]]
    %v124 = vstv %s123
    %v125 = vmul.f32 %v32, %v124
    %v126 = vmul.f32 %v33, %v124
    %s127 = sld [smem:[#allocation3 + $0x5]]
    %v128 = vstv %s127
    %v129 = vmul.f32 %v32, %v128
    %v130 = vmul.f32 %v33, %v128
    %v133 = vrot.slane %v129, 5
    %v134 = vrot.slane %v133, 4
    %v135 = vrot.slane %v130, 5
    %v136 = vrot.slane %v135, 4
    %v139 = vadd.f32 %v125, %v134
    %v140 = vadd.f32 %v126, %v136
    %s141 = sld [smem:[#allocation3 + $0x6]]
    %v142 = vstv %s141
    %v143 = vmul.f32 %v32, %v142
    %v144 = vmul.f32 %v33, %v142
    %v147 = vrot.slane %v143, 6
    %v148 = vrot.slane %v147, 4
    %v149 = vrot.slane %v144, 6
    %v150 = vrot.slane %v149, 4
    %v153 = vadd.f32 %v139, %v148
    %v154 = vadd.f32 %v140, %v150
    %s155 = sld [smem:[#allocation3 + $0x7]]
    %v156 = vstv %s155
    %v157 = vmul.f32 %v32, %v156
    %v158 = vmul.f32 %v33, %v156
    %v161 = vrot.slane %v157, 7
    %v162 = vrot.slane %v161, 4
    %v163 = vrot.slane %v158, 7
    %v164 = vrot.slane %v163, 4
    %v167 = vadd.f32 %v153, %v162
    %v168 = vadd.f32 %v154, %v164
    %s169 = sld [smem:[#allocation4 + $0x1]]
    %v170 = vstv %s169
    %v171 = vadd.f32 %v167, %v170
    %v172 = vadd.f32 %v168, %v170
    %v176 = vunpack.c.l.s4 1966171168
    %v177 = vunpack.c.0.s8 %v176
    %v178 = vlaneseq
    %v179 = vshrl.u32 %v178, 7
    %v180 = vsub.s32 %v177, %v179
    %v181 = vrot.slane %v171, %v180
    %v183 = vunpack.c.l.s4 1966171168
    %v184 = vunpack.c.0.s8 %v183
    %v185 = vlaneseq
    %v186 = vshrl.u32 %v185, 7
    %v187 = vsub.s32 %v184, %v186
    %v188 = vrot.slane %v181, %v187
    %v190 = vunpack.c.l.s4 1966171168
    %v191 = vunpack.c.0.s8 %v190
    %v192 = vlaneseq
    %v193 = vshrl.u32 %v192, 7
    %v194 = vsub.s32 %v191, %v193
    %v195 = vrot.slane %v172, %v194
    %v197 = vunpack.c.l.s4 1966171168
    %v198 = vunpack.c.0.s8 %v197
    %v199 = vlaneseq
    %v200 = vshrl.u32 %v199, 7
    %v201 = vsub.s32 %v198, %v200
    %v202 = vrot.slane %v195, %v201
    %s205 = scalar_lea.vmem %s3, 1
    %206 = vst.msk [vmem:[%s205] ss:$4 sm:$0x3] %vm119, %v188
    %s207 = scalar_lea.vmem %s3, 9
    %208 = vst.msk [vmem:[%s207] ss:$4 sm:$0x3] %vm119, %v202
    %s209 = sld [smem:[#allocation3 + $0x8]]
    %v210 = vstv %s209
    %v211 = vmul.f32 %v32, %v210
    %v212 = vmul.f32 %v33, %v210
    %s213 = sld [smem:[#allocation3 + $0x9]]
    %v214 = vstv %s213
    %v215 = vmul.f32 %v32, %v214
    %v216 = vmul.f32 %v33, %v214
    %v219 = vrot.slane %v215, 5
    %v220 = vrot.slane %v219, 4
    %v221 = vrot.slane %v216, 5
    %v222 = vrot.slane %v221, 4
    %v225 = vadd.f32 %v211, %v220
    %v226 = vadd.f32 %v212, %v222
    %s227 = sld [smem:[#allocation3 + $0xa]]
    %v228 = vstv %s227
    %v229 = vmul.f32 %v32, %v228
    %v230 = vmul.f32 %v33, %v228
    %v233 = vrot.slane %v229, 6
    %v234 = vrot.slane %v233, 4
    %v235 = vrot.slane %v230, 6
    %v236 = vrot.slane %v235, 4
    %v239 = vadd.f32 %v225, %v234
    %v240 = vadd.f32 %v226, %v236
    %s241 = sld [smem:[#allocation3 + $0xb]]
    %v242 = vstv %s241
    %v243 = vmul.f32 %v32, %v242
    %v244 = vmul.f32 %v33, %v242
    %v247 = vrot.slane %v243, 7
    %v248 = vrot.slane %v247, 4
    %v249 = vrot.slane %v244, 7
    %v250 = vrot.slane %v249, 4
    %v253 = vadd.f32 %v239, %v248
    %v254 = vadd.f32 %v240, %v250
    %s255 = sld [smem:[#allocation4 + $0x2]]
    %v256 = vstv %s255
    %v257 = vadd.f32 %v253, %v256
    %v258 = vadd.f32 %v254, %v256
    %v262 = vunpack.c.l.s4 1966171168
    %v263 = vunpack.c.0.s8 %v262
    %v264 = vlaneseq
    %v265 = vshrl.u32 %v264, 7
    %v266 = vsub.s32 %v263, %v265
    %v267 = vrot.slane %v257, %v266
    %v269 = vunpack.c.l.s4 1966171168
    %v270 = vunpack.c.0.s8 %v269
    %v271 = vlaneseq
    %v272 = vshrl.u32 %v271, 7
    %v273 = vsub.s32 %v270, %v272
    %v274 = vrot.slane %v267, %v273
    %v276 = vunpack.c.l.s4 1966171168
    %v277 = vunpack.c.0.s8 %v276
    %v278 = vlaneseq
    %v279 = vshrl.u32 %v278, 7
    %v280 = vsub.s32 %v277, %v279
    %v281 = vrot.slane %v258, %v280
    %v283 = vunpack.c.l.s4 1966171168
    %v284 = vunpack.c.0.s8 %v283
    %v285 = vlaneseq
    %v286 = vshrl.u32 %v285, 7
    %v287 = vsub.s32 %v284, %v286
    %v288 = vrot.slane %v281, %v287
    %s291 = scalar_lea.vmem %s3, 2
    %292 = vst.msk [vmem:[%s291] ss:$4 sm:$0x3] %vm119, %v274
    %s293 = scalar_lea.vmem %s3, 10
    %294 = vst.msk [vmem:[%s293] ss:$4 sm:$0x3] %vm119, %v288
    // Predicated region
    $region10: #{tpu_custom_call.1} parent=1 // pred_check
      _
    $region11: #{tpu_custom_call.1} parent=1 // pred_check_branch
      %296 = sbr.rel (0) target = $region13
    $region12: #{tpu_custom_call.1} parent=1 // pred_region
      _
    $region13: #{tpu_custom_call.1} parent=1 // pred_fallthru
      _
    // Predicated region
    $region14: #{tpu_custom_call.1} parent=1 // pred_check
      _
    $region15: #{tpu_custom_call.1} parent=1 // pred_check_branch
      %298 = sbr.rel (0) target = $region17
    $region16: #{tpu_custom_call.1} parent=1 // pred_region
      _
    $region17: #{tpu_custom_call.1} parent=1 // pred_fallthru
      _
    %299 = vsyncpa [#allocation6], 1

</llo_original>
